<compile_context>
chip_gen: v7x
topology: tpu7x:2x2x1
jax: 0.10.0
libtpu: 0.0.40
codegen_flags: <defaults>
</compile_context>

<pallas_src>
import functools

import jax
import jax.numpy as jnp
from jax.experimental import pallas as pl
from jax.experimental.pallas import tpu as pltpu

_MB = 1024 * 1024


def _round_up(x, m):
    return (x + m - 1) // m * m


# ----------------------------------------------------------------------------
# Kernel body
# ----------------------------------------------------------------------------
def ffn_kernel(h_ref, w1_ref, b1_ref, w2_ref, b2_ref, o_ref, acc_ref):
    k = pl.program_id(1)

    @pl.when(k == 0)
    def _():
        acc_ref[...] = jnp.zeros_like(acc_ref)

    # fc1 chunk: [TM, Hp] @ [Hp, TI] -> f32; bias + ReLU in f32 on the VPU
    # (v5e has no bf16 VALUs; f32 is also numerically safer everywhere).
    h1 = jnp.dot(h_ref[...], w1_ref[...], preferred_element_type=jnp.float32)
    h1 = jnp.maximum(h1 + b1_ref[...], 0.0)
    # Dropout: eval-mode identity.
    # TODO(synk): training-mode dropout would use pltpu.prng_seed/prng_random_bits.

    # fc2 partial product over this inner-hidden chunk, accumulated in f32 scratch.
    acc_ref[...] += jnp.dot(h1.astype(w2_ref.dtype), w2_ref[...],
                            preferred_element_type=jnp.float32)

    @pl.when(k == pl.num_programs(1) - 1)
    def _():
        o_ref[...] = (acc_ref[...] + b2_ref[...]).astype(o_ref.dtype)


# ----------------------------------------------------------------------------
# Per-generation planning
# ----------------------------------------------------------------------------
def _chip_plan():
    """Detect TPU generation -> (tm_target, vmem_budget, vmem_limit, multi_core)."""
    try:
        kind = jax.devices()[0].device_kind.lower()
    except Exception:
        kind = ""
    if any(s in kind for s in ("v2", "v3", "v4", "v5", "v6")):
        # 128 MiB physical VMEM (v5e / v6e / ...): spend it on big tiles.
        tm_target, budget, limit = 1024, 88 * _MB, 100 * _MB
    else:
        # v7x (or unknown chip): 64 MiB VMEM per TensorCore -> conservative.
        tm_target, budget, limit = 512, 46 * _MB, 56 * _MB
    # Chips whose grid "parallel" axes shard across multiple TensorCores.
    multi_core = any(s in kind for s in ("v7", "v4", "v5p", "v5 p"))
    return tm_target, budget, limit, multi_core


def _vmem_estimate(tm, ti, hp, c_bytes, o_bytes):
    """Double-buffered pipelined blocks + resident f32 accumulator."""
    return (2 * tm * hp * c_bytes      # activation tile
            + 2 * hp * ti * c_bytes    # w1 chunk
            + 2 * ti * hp * c_bytes    # w2 chunk
            + 2 * 8 * ti * 4           # b1 chunk (sublane-padded)
            + 2 * 8 * hp * 4           # b2
            + 2 * tm * hp * o_bytes    # output tile
            + tm * hp * 4)             # accumulator scratch


def _choose_tiles(H, I, c_bytes, o_bytes):
    """Pick (Hp, Ip, TI, tm_cap, vmem_limit, multi_core) for this chip/model."""
    Hp = _round_up(H, 128)
    tm_target, budget, limit, multi_core = _chip_plan()
    ti_cap = _round_up(I, 128)

    # Prefer the biggest TM (weight-stream intensity), then the biggest TI
    # (fewer k steps -> less accumulator RMW + per-step overhead).
    best = None
    for tm in (1024, 768, 512, 256, 128, 64, 32, 16):
        if tm > tm_target:
            continue
        for ti in (1024, 512, 256, 128):
            ti_eff = min(ti, ti_cap)
            if _vmem_estimate(tm, ti_eff, Hp, c_bytes, o_bytes) <= budget:
                best = (tm, ti_eff)
                break
        if best is not None:
            break
    if best is None:  # absurdly large H: smallest tiles, let the compiler cope
        best = (16, 128)
    tm_cap, TI = best
    # TODO(synk): for v7x with very large H (~8K+) a third grid axis tiling the
    # output-hidden dim (indexing w2/b2/out/acc by it) would keep TM/TI large;
    # the current plan instead falls back to smaller TM/TI to stay in 64 MiB.
    Ip = _round_up(I, TI)
    return Hp, Ip, TI, tm_cap, limit, multi_core


def _choose_tm(T, tm_cap, multi_core):
    """Token tile: >= 16 (bf16 sublane tile), multiple of 256 for T >= 256,
    and >= 2 token tiles on multi-TC chips so both cores get work."""
    if T < 256:
        return max(16, min(_round_up(T, 16), _round_up(tm_cap, 16)))
    TM = min(tm_cap, _round_up(T, 256))
    if multi_core and T >= 512:
        half = _round_up((T + 1) // 2, 256)
        TM = min(TM, max(256, half))
    return TM


# ----------------------------------------------------------------------------
# Jitted 2-D entry point (weights arrive pre-padded / pre-cast)
# ----------------------------------------------------------------------------
@functools.partial(
    jax.jit,
    static_argnames=("H", "Hp", "Ip", "TI", "tm_cap", "multi_core",
                     "vmem_limit", "compute_dtype", "out_dtype"))
def _ffn_2d(h, w1_p, b1_p, w2_p, b2_p, *, H, Hp, Ip, TI, tm_cap, multi_core,
            vmem_limit, compute_dtype, out_dtype):
    T = h.shape[0]
    TM = _choose_tm(T, tm_cap, multi_core)
    Tp = _round_up(T, TM)

    # Zero padding keeps the math exact; padded output region sliced off below.
    h_p = jnp.pad(h, ((0, Tp - T), (0, Hp - H))).astype(compute_dtype)

    grid = (Tp // TM, Ip // TI)
    n_tok_tiles = grid[0]
    csize = jnp.dtype(compute_dtype).itemsize
    osize = jnp.dtype(out_dtype).itemsize
    cost = pl.CostEstimate(
        flops=4 * Tp * Hp * Ip,                    # two matmuls: 2*T*H*I each
        transcendentals=0,
        bytes_accessed=(Tp * Hp * csize                         # activations in
                        + n_tok_tiles * 2 * Hp * Ip * csize     # w1+w2 per token tile
                        + n_tok_tiles * (Ip + Hp) * 4           # biases
                        + Tp * Hp * osize),                     # output
    )

    out_p = pl.pallas_call(
        ffn_kernel,
        out_shape=jax.ShapeDtypeStruct((Tp, Hp), out_dtype),
        grid=grid,
        in_specs=[
            pl.BlockSpec((TM, Hp), lambda i, k: (i, 0)),   # activation tile
            pl.BlockSpec((Hp, TI), lambda i, k: (0, k)),   # fc1 weight chunk
            pl.BlockSpec((1, TI), lambda i, k: (0, k)),    # fc1 bias chunk
            pl.BlockSpec((TI, Hp), lambda i, k: (k, 0)),   # fc2 weight chunk
            pl.BlockSpec((1, Hp), lambda i, k: (0, 0)),    # fc2 bias (resident)
        ],
        out_specs=pl.BlockSpec((TM, Hp), lambda i, k: (i, 0)),
        scratch_shapes=[pltpu.VMEM((TM, Hp), jnp.float32)],
        compiler_params=pltpu.CompilerParams(
            # Token tiles are independent; inner-hidden axis is a reduction.
            dimension_semantics=("parallel", "arbitrary"),
            vmem_limit_bytes=vmem_limit,
        ),
        cost_estimate=cost,
    )(h_p, w1_p, b1_p, w2_p, b2_p)

    return out_p[:T, :H]


# ----------------------------------------------------------------------------
# Module-style wrapper: weights padded / cast ONCE at construction
# ----------------------------------------------------------------------------
class FeedForward:
    """Eval-mode FeedForwardLayer: fc2(relu(fc1(x))); dropout is identity.

    Weights are stored pre-transposed as [in, out] (y = x @ W + b), padded to
    lane-dense shapes, and cast to the compute dtype once at construction so no
    per-call pad/cast traffic precedes the kernel.
    """

    def __init__(self, w1, b1, w2, b2, *, compute_dtype=jnp.bfloat16, out_dtype=None):
        H, I = w1.shape
        assert w2.shape == (I, H) and b1.shape == (1, I) and b2.shape == (1, H)
        self.H, self.I = H, I
        self.compute_dtype = compute_dtype
        self.out_dtype = out_dtype if out_dtype is not None else compute_dtype

        (self.Hp, self.Ip, self.TI, self.tm_cap,
         self.vmem_limit, self.multi_core) = _choose_tiles(
            H, I,
            jnp.dtype(compute_dtype).itemsize,
            jnp.dtype(self.out_dtype).itemsize)

        Hp, Ip = self.Hp, self.Ip
        self.w1_p = jnp.pad(w1, ((0, Hp - H), (0, Ip - I))).astype(compute_dtype)
        self.w2_p = jnp.pad(w2, ((0, Ip - I), (0, Hp - H))).astype(compute_dtype)
        self.b1_p = jnp.pad(b1, ((0, 0), (0, Ip - I))).astype(jnp.float32)
        self.b2_p = jnp.pad(b2, ((0, 0), (0, Hp - H))).astype(jnp.float32)

    def __call__(self, h):
        lead = h.shape[:-1]
        h2d = h.reshape(-1, self.H)
        out2d = _ffn_2d(
            h2d, self.w1_p, self.b1_p, self.w2_p, self.b2_p,
            H=self.H, Hp=self.Hp, Ip=self.Ip, TI=self.TI,
            tm_cap=self.tm_cap, multi_core=self.multi_core,
            vmem_limit=self.vmem_limit,
            compute_dtype=self.compute_dtype, out_dtype=self.out_dtype)
        return out2d.reshape(*lead, self.H)


if __name__ == "__main__":
    # Module config: hidden_size=32, inner_hidden_size=64, dropout=0.1 (eval -> identity)
    hidden_size = 32
    inner_hidden_size = 64
    batch, seq = 2, 8

    key = jax.random.PRNGKey(0)
    k_x, k_w1, k_b1, k_w2, k_b2 = jax.random.split(key, 5)

    # Deterministic parameter init (uniform, akin to torch Linear default range).
    lim1 = 1.0 / (hidden_size ** 0.5)
    lim2 = 1.0 / (inner_hidden_size ** 0.5)
    w1 = jax.random.uniform(k_w1, (hidden_size, inner_hidden_size),
                            jnp.float32, -lim1, lim1)   # fc1.weight.T
    b1 = jax.random.uniform(k_b1, (1, inner_hidden_size),
                            jnp.float32, -lim1, lim1)   # fc1.bias
    w2 = jax.random.uniform(k_w2, (inner_hidden_size, hidden_size),
                            jnp.float32, -lim2, lim2)   # fc2.weight.T
    b2 = jax.random.uniform(k_b2, (1, hidden_size),
                            jnp.float32, -lim2, lim2)   # fc2.bias

    x = jax.random.normal(k_x, (batch, seq, hidden_size), jnp.float32)

    ffn = FeedForward(w1, b1, w2, b2)          # pad + bf16 cast happens once here
    out = ffn(x)                               # [B, S, H] -> [B, S, H]
    jax.block_until_ready(out)

    # f32 reference; the kernel uses bf16 MXU inputs with f32 accumulation and a
    # bf16 output store, so the tolerance reflects bf16 rounding.
    x2d = x.reshape(batch * seq, hidden_size)
    ref = jnp.maximum(x2d @ w1 + b1, 0.0) @ w2 + b2
    out2d = out.reshape(batch * seq, hidden_size).astype(jnp.float32)
    max_err = float(jnp.max(jnp.abs(out2d - ref)))
    assert jnp.allclose(out2d, ref, atol=3e-2, rtol=3e-2), max_err

    print("KERNEL_OK")
</pallas_src>

<mosaic_0001>
module attributes {stable_mosaic.version = 11 : i64} {
  func.func @ffn_kernel(%arg0: i32, %arg1: i32, %arg2: memref<16x128xbf16, #tpu.memory_space<vmem>>, %arg3: memref<128x128xbf16, #tpu.memory_space<vmem>>, %arg4: memref<1x128xf32, #tpu.memory_space<vmem>>, %arg5: memref<128x128xbf16, #tpu.memory_space<vmem>>, %arg6: memref<1x128xf32, #tpu.memory_space<vmem>>, %arg7: memref<16x128xbf16, #tpu.memory_space<vmem>>, %arg8: memref<16x128xf32, #tpu.memory_space<vmem>>) attributes {dimension_semantics = [#tpu.dimension_semantics<parallel>, #tpu.dimension_semantics<arbitrary>], iteration_bounds = array<i64: 1, 1>, scalar_prefetch = 0 : i64, scratch_operands = 1 : i64, tpu.core_type = #tpu.core_type<tc>, window_params = [{transform_indices = @transform_0, window_bounds = array<i64: 16, 128>}, {transform_indices = @transform_1, window_bounds = array<i64: 128, 128>}, {transform_indices = @transform_2, window_bounds = array<i64: 1, 128>}, {transform_indices = @transform_3, window_bounds = array<i64: 128, 128>}, {pipeline_mode = #tpu.pipeline_mode<synchronous>, transform_indices = @transform_4, window_bounds = array<i64: 1, 128>}, {transform_indices = @transform_5, window_bounds = array<i64: 16, 128>}]} {
    %c0_i32 = arith.constant 0 : i32
    %0 = arith.cmpi eq, %arg1, %c0_i32 : i32
    %1 = arith.extui %0 : i1 to i32
    %c0_i32_0 = arith.constant 0 : i32
    %2 = arith.cmpi ne, %1, %c0_i32_0 : i32
    scf.if %2 {
      %cst_16 = arith.constant 0.000000e+00 : f32
      %20 = vector.broadcast %cst_16 : f32 to vector<16x128xf32>
      %c0_17 = arith.constant 0 : index
      %c0_18 = arith.constant 0 : index
      %21 = vector.load %arg8[%c0_17, %c0_18] : memref<16x128xf32, #tpu.memory_space<vmem>>, vector<16x128xf32>
      tpu.vector_store %arg8[%c0_17, %c0_18], %20 {strides = array<i32>} : memref<16x128xf32, #tpu.memory_space<vmem>>, vector<16x128xf32>,
    } else {
    }
    %c0 = arith.constant 0 : index
    %c0_1 = arith.constant 0 : index
    %3 = vector.load %arg2[%c0, %c0_1] : memref<16x128xbf16, #tpu.memory_space<vmem>>, vector<16x128xbf16>
    %c0_2 = arith.constant 0 : index
    %c0_3 = arith.constant 0 : index
    %4 = vector.load %arg3[%c0_2, %c0_3] : memref<128x128xbf16, #tpu.memory_space<vmem>>, vector<128x128xbf16>
    %cst = arith.constant dense<0.000000e+00> : vector<16x128xf32>
    %5 = tpu.matmul %3, %4, %cst {dimension_numbers = #tpu.dot_dimension_numbers<[1], [0], [0], [1], [0, 0, 1, 1], [], []>} : vector<16x128xbf16>, vector<128x128xbf16>, vector<16x128xf32> -> vector<16x128xf32>
    %c0_4 = arith.constant 0 : index
    %c0_5 = arith.constant 0 : index
    %6 = vector.load %arg4[%c0_4, %c0_5] : memref<1x128xf32, #tpu.memory_space<vmem>>, vector<1x128xf32>
    %7 = vector.broadcast %6 : vector<1x128xf32> to vector<16x128xf32>
    %8 = arith.addf %5, %7 : vector<16x128xf32>
    %cst_6 = arith.constant 0.000000e+00 : f32
    %9 = vector.broadcast %cst_6 : f32 to vector<16x128xf32>
    %10 = arith.maximumf %8, %9 : vector<16x128xf32>
    %c0_7 = arith.constant 0 : index
    %c0_8 = arith.constant 0 : index
    %11 = vector.load %arg8[%c0_7, %c0_8] : memref<16x128xf32, #tpu.memory_space<vmem>>, vector<16x128xf32>
    %12 = arith.truncf %10 : vector<16x128xf32> to vector<16x128xbf16>
    %c0_9 = arith.constant 0 : index
    %c0_10 = arith.constant 0 : index
    %13 = vector.load %arg5[%c0_9, %c0_10] : memref<128x128xbf16, #tpu.memory_space<vmem>>, vector<128x128xbf16>
    %cst_11 = arith.constant dense<0.000000e+00> : vector<16x128xf32>
    %14 = tpu.matmul %12, %13, %cst_11 {dimension_numbers = #tpu.dot_dimension_numbers<[1], [0], [0], [1], [0, 0, 1, 1], [], []>} : vector<16x128xbf16>, vector<128x128xbf16>, vector<16x128xf32> -> vector<16x128xf32>
    %15 = arith.addf %11, %14 : vector<16x128xf32>
    %c0_12 = arith.constant 0 : index
    %c0_13 = arith.constant 0 : index
    %16 = vector.load %arg8[%c0_12, %c0_13] : memref<16x128xf32, #tpu.memory_space<vmem>>, vector<16x128xf32>
    tpu.vector_store %arg8[%c0_12, %c0_13], %15 {strides = array<i32>} : memref<16x128xf32, #tpu.memory_space<vmem>>, vector<16x128xf32>,
    %c0_i32_14 = arith.constant 0 : i32
    %17 = arith.cmpi eq, %arg1, %c0_i32_14 : i32
    %18 = arith.extui %17 : i1 to i32
    %c0_i32_15 = arith.constant 0 : i32
    %19 = arith.cmpi ne, %18, %c0_i32_15 : i32
    scf.if %19 {
      %c0_16 = arith.constant 0 : index
      %c0_17 = arith.constant 0 : index
      %20 = vector.load %arg8[%c0_16, %c0_17] : memref<16x128xf32, #tpu.memory_space<vmem>>, vector<16x128xf32>
      %c0_18 = arith.constant 0 : index
      %c0_19 = arith.constant 0 : index
      %21 = vector.load %arg6[%c0_18, %c0_19] : memref<1x128xf32, #tpu.memory_space<vmem>>, vector<1x128xf32>
      %22 = vector.broadcast %21 : vector<1x128xf32> to vector<16x128xf32>
      %23 = arith.addf %20, %22 : vector<16x128xf32>
      %24 = arith.truncf %23 : vector<16x128xf32> to vector<16x128xbf16>
      %c0_20 = arith.constant 0 : index
      %c0_21 = arith.constant 0 : index
      %25 = vector.load %arg7[%c0_20, %c0_21] : memref<16x128xbf16, #tpu.memory_space<vmem>>, vector<16x128xbf16>
      tpu.vector_store %arg7[%c0_20, %c0_21], %24 {strides = array<i32>} : memref<16x128xbf16, #tpu.memory_space<vmem>>, vector<16x128xbf16>,
    } else {
    }
    return
  }
  func.func @transform_0(%arg0: i32, %arg1: i32) -> (i32, i32) {
    %c0_i32 = arith.constant 0 : i32
    %c0_i32_0 = arith.constant 0 : i32
    return %arg0, %c0_i32 : i32, i32
  }
  func.func @transform_1(%arg0: i32, %arg1: i32) -> (i32, i32) {
    %c0_i32 = arith.constant 0 : i32
    %c0_i32_0 = arith.constant 0 : i32
    return %c0_i32, %arg1 : i32, i32
  }
  func.func @transform_2(%arg0: i32, %arg1: i32) -> (i32, i32) {
    %c0_i32 = arith.constant 0 : i32
    %c0_i32_0 = arith.constant 0 : i32
    return %c0_i32, %arg1 : i32, i32
  }
  func.func @transform_3(%arg0: i32, %arg1: i32) -> (i32, i32) {
    %c0_i32 = arith.constant 0 : i32
    %c0_i32_0 = arith.constant 0 : i32
    return %arg1, %c0_i32 : i32, i32
  }
  func.func @transform_4(%arg0: i32, %arg1: i32) -> (i32, i32) {
    %c0_i32 = arith.constant 0 : i32
    %c0_i32_0 = arith.constant 0 : i32
    %c0_i32_1 = arith.constant 0 : i32
    return %c0_i32, %c0_i32_0 : i32, i32
  }
  func.func @transform_5(%arg0: i32, %arg1: i32) -> (i32, i32) {
    %c0_i32 = arith.constant 0 : i32
    %c0_i32_0 = arith.constant 0 : i32
    return %arg0, %c0_i32 : i32, i32
  }
}

</mosaic_0001>

<llo_original>
// kernel: _ffn_2d.1
$region0: #{_ffn_2d.1}
  #allocation0 [shape = 'u32[]', space=smem, size = 0x4, offset = 0x4, fixed_abs, tag = 'smem constant byte address 0x4 - core index']
  #allocation1 [shape = 'u32[144,128]{1,0:T(1,128)}', space=vmem, size = 0x12000, scoped, tag = 'internal scratch']
  #allocation2 [shape = 'f32[16,128]{1,0:T(8,128)}', space=vmem, size = 0x2000, scoped, tag = 'scratch operand']
  %s0 = inlined_call_operand.vmem [shape: bf16[16,128], index: 0, kind: input, shape index: {}]
  %s1 = inlined_call_operand.hbm [shape: bf16[128,128], index: 1, kind: input, shape index: {}]
  %s2 = inlined_call_operand.vmem [shape: f32[1,128], index: 2, kind: input, shape index: {}]
  %s3 = inlined_call_operand.hbm [shape: bf16[128,128], index: 3, kind: input, shape index: {}]
  %s4 = inlined_call_operand.vmem [shape: f32[1,128], index: 4, kind: input, shape index: {}]
  %s5 = inlined_call_operand.hbm [shape: bf16[16,128], index: 5, kind: output, shape index: {}]
  %s6 = sld [smem:[#allocation0]]
  $region46: #{_ffn_2d.1} parent=0
    _
  %s8 = ssub.s32 1, %s6
  %s9 = scalar_select 0, %s8, %s6
  $region1: #{_ffn_2d.1} parent=0
    #allocation3 [shape = 'u8[32768]{0}', space=vmem, size = 0x8000, scoped, tag = 'input window, operand 1, single buffered']
    #allocation4 [shape = 's32[1]{0}', space=sflag, size = 0x4, scoped, tag = 'scoped memory for _ffn_2d.1']
    #allocation5 [shape = 's32[1]{0}', space=sflag, size = 0x4, scoped, tag = 'scoped memory for _ffn_2d.1']
    #allocation6 [shape = 'u8[32768]{0}', space=vmem, size = 0x8000, scoped, tag = 'input window, operand 3, single buffered']
    #allocation7 [shape = 's32[1]{0}', space=sflag, size = 0x4, scoped, tag = 'scoped memory for _ffn_2d.1']
    #allocation8 [shape = 'u8[4096]{0}', space=vmem, size = 0x1000, scoped, tag = 'output window, operand 0, single buffered']
    %10 = vsyncpa [#allocation4], 0
    %11 = vsyncpa [#allocation7], 0
    %12 = vsyncpa [#allocation5], 0
    // Predicated region
    $region2: #{_ffn_2d.1} parent=1 // pred_check
      _
    $region3: #{_ffn_2d.1} parent=1 // pred_check_branch
      %14 = sbr.rel (0) target = $region5
    $region4: #{_ffn_2d.1} parent=1 // pred_region
      _
    $region5: #{_ffn_2d.1} parent=1 // pred_fallthru
      _
    // Predicated region
    $region6: #{_ffn_2d.1} parent=1 // pred_check
      _
    $region7: #{_ffn_2d.1} parent=1 // pred_check_branch
      %16 = sbr.rel (0) target = $region9
    $region8: #{_ffn_2d.1} parent=1 // pred_region
      %s18 = ssub.s32 1024, 1024
      %19 = vsyncadd [#allocation4], %s18
      %s20 = sshll.u32 [#allocation3], 4
      %s21 = int_to_ptr.vmem [resolvable:$true] %s20
      %26 = dma.hbm_to_vmem [thread:$0]  %s1, 1024, %s21, [#allocation4], 64, 64, 4
    $region9: #{_ffn_2d.1} parent=1 // pred_fallthru
      _
    // Predicated region
    $region10: #{_ffn_2d.1} parent=1 // pred_check
      _
    $region11: #{_ffn_2d.1} parent=1 // pred_check_branch
      %28 = sbr.rel (0) target = $region13
    $region12: #{_ffn_2d.1} parent=1 // pred_region
      _
    $region13: #{_ffn_2d.1} parent=1 // pred_fallthru
      _
    // Predicated region
    $region14: #{_ffn_2d.1} parent=1 // pred_check
      _
    $region15: #{_ffn_2d.1} parent=1 // pred_check_branch
      %30 = sbr.rel (0) target = $region17
    $region16: #{_ffn_2d.1} parent=1 // pred_region
      %s32 = ssub.s32 1024, 1024
      %33 = vsyncadd [#allocation7], %s32
      %s34 = sshll.u32 [#allocation6], 4
      %s35 = int_to_ptr.vmem [resolvable:$true] %s34
      %40 = dma.hbm_to_vmem [thread:$0]  %s3, 1024, %s35, [#allocation7], 64, 64, 4
    $region17: #{_ffn_2d.1} parent=1 // pred_fallthru
      _
    // Predicated region
    $region18: #{_ffn_2d.1} parent=1 // pred_check
      _
    $region19: #{_ffn_2d.1} parent=1 // pred_check_branch
      %42 = sbr.rel (0) target = $region21
    $region20: #{_ffn_2d.1} parent=1 // pred_region
      _
    $region21: #{_ffn_2d.1} parent=1 // pred_fallthru
      _
    // Predicated region
    $region22: #{_ffn_2d.1} parent=1 // pred_check
      _
    $region23: #{_ffn_2d.1} parent=1 // pred_check_branch
      %44 = sbr.rel (0) target = $region25
    $region24: #{_ffn_2d.1} parent=1 // pred_region
      %45 = dma.done [#allocation4], 1024
    $region25: #{_ffn_2d.1} parent=1 // pred_fallthru
      _
    // Predicated region
    $region26: #{_ffn_2d.1} parent=1 // pred_check
      _
    $region27: #{_ffn_2d.1} parent=1 // pred_check_branch
      %47 = sbr.rel (0) target = $region29
    $region28: #{_ffn_2d.1} parent=1 // pred_region
      %48 = dma.done [#allocation7], 1024
    $region29: #{_ffn_2d.1} parent=1 // pred_fallthru
      _
    %p50 = scmp.eq.s32.totalorder 0, 0
    // Predicated region
    $region30: #{_ffn_2d.1} parent=1 // pred_check
      %p51 = pneg %p50
    $region31: #{_ffn_2d.1} parent=1 // pred_check_branch
      %53 = sbr.rel (%p51) target = $region33
    $region32: #{_ffn_2d.1} parent=1 // pred_region
      %54 = vst [vmem:[#allocation2] sm:$0xff] 0.0
      %55 = vst [vmem:[#allocation2 + $0x8] sm:$0xff] 0.0
    $region33: #{_ffn_2d.1} parent=1 // pred_fallthru
      _
    %v56 = vld [vmem:[%s0] sm:$0xf]
    %v57 = vld [vmem:[%s0 + $0x4] sm:$0xf]
    %v58 = vld [vmem:[#allocation3] sm:$0xf]
    %v59 = vld [vmem:[#allocation3 + $0x4] sm:$0xf]
    %v60 = vld [vmem:[#allocation3 + $0x8] sm:$0xf]
    %v61 = vld [vmem:[#allocation3 + $0xc] sm:$0xf]
    %v62 = vld [vmem:[#allocation3 + $0x10] sm:$0xf]
    %v63 = vld [vmem:[#allocation3 + $0x14] sm:$0xf]
    %v64 = vld [vmem:[#allocation3 + $0x18] sm:$0xf]
    %v65 = vld [vmem:[#allocation3 + $0x1c] sm:$0xf]
    %v66 = vld [vmem:[#allocation3 + $0x20] sm:$0xf]
    %v67 = vld [vmem:[#allocation3 + $0x24] sm:$0xf]
    %v68 = vld [vmem:[#allocation3 + $0x28] sm:$0xf]
    %v69 = vld [vmem:[#allocation3 + $0x2c] sm:$0xf]
    %v70 = vld [vmem:[#allocation3 + $0x30] sm:$0xf]
    %v71 = vld [vmem:[#allocation3 + $0x34] sm:$0xf]
    %v72 = vld [vmem:[#allocation3 + $0x38] sm:$0xf]
    %v73 = vld [vmem:[#allocation3 + $0x3c] sm:$0xf]
    %v74 = vld [vmem:[%s2] sm:$0x1]
    %v76 = vlaneseq
    %v77 = vshrl.u32 %v76, 7
    %v78 = vsub.s32 0, %v77
    %v79 = vrot.slane %v74, %v78
    %v83 = vunpack.c.l.b16 %v56
    %v84 = vunpack.c.l.b16 %v57
    %v85 = vpack.c.b16 %v84, %v83
    %v103 = vunpack.c.l.b16 %v58
    %v104 = vunpack.c.l.b16 %v59
    %v105 = vunpack.c.l.b16 %v60
    %v106 = vunpack.c.l.b16 %v61
    %v107 = vunpack.c.l.b16 %v62
    %v108 = vunpack.c.l.b16 %v63
    %v109 = vunpack.c.l.b16 %v64
    %v110 = vunpack.c.l.b16 %v65
    %v111 = vunpack.c.l.b16 %v66
    %v112 = vunpack.c.l.b16 %v67
    %v113 = vunpack.c.l.b16 %v68
    %v114 = vunpack.c.l.b16 %v69
    %v115 = vunpack.c.l.b16 %v70
    %v116 = vunpack.c.l.b16 %v71
    %v117 = vunpack.c.l.b16 %v72
    %v118 = vunpack.c.l.b16 %v73
    %v119 = vpack.c.b16 %v104, %v103
    %v120 = vpack.c.b16 %v106, %v105
    %v121 = vpack.c.b16 %v108, %v107
    %v122 = vpack.c.b16 %v110, %v109
    %v123 = vpack.c.b16 %v112, %v111
    %v124 = vpack.c.b16 %v114, %v113
    %v125 = vpack.c.b16 %v116, %v115
    %v126 = vpack.c.b16 %v118, %v117
    %135 = vmatprep.subr.bf16.mxu0 0
    %136 = vmatpush1.bf16.msra.mxu0 %v119
    %137 = vmatprep.subr.bf16.mxu0 0
    %138 = vmatpush1.bf16.msra.mxu0 %v120
    %139 = vmatprep.subr.bf16.mxu0 0
    %140 = vmatpush1.bf16.msra.mxu0 %v121
    %141 = vmatprep.subr.bf16.mxu0 0
    %142 = vmatpush1.bf16.msra.mxu0 %v122
    %143 = vmatprep.subr.bf16.mxu0 0
    %144 = vmatpush1.bf16.msra.mxu0 %v123
    %145 = vmatprep.subr.bf16.mxu0 0
    %146 = vmatpush1.bf16.msra.mxu0 %v124
    %147 = vmatprep.subr.bf16.mxu0 0
    %148 = vmatpush1.bf16.msra.mxu0 %v125
    %149 = vmatprep.subr.bf16.mxu0 0
    %150 = vmatpush1.bf16.msra.mxu0 %v126
    %151 = vmatprep.subr.bf16.mxu0 0
    %152 = vmatpush1.bf16.msra.mxu0 0
    %153 = vmatprep.subr.bf16.mxu0 0
    %154 = vmatpush1.bf16.msra.mxu0 0
    %155 = vmatprep.subr.bf16.mxu0 0
    %156 = vmatpush1.bf16.msra.mxu0 0
    %157 = vmatprep.subr.bf16.mxu0 0
    %158 = vmatpush1.bf16.msra.mxu0 0
    %159 = vmatprep.subr.bf16.mxu0 0
    %160 = vmatpush1.bf16.msra.mxu0 0
    %161 = vmatprep.subr.bf16.mxu0 0
    %162 = vmatpush1.bf16.msra.mxu0 0
    %163 = vmatprep.subr.bf16.mxu0 0
    %164 = vmatpush1.bf16.msra.mxu0 0
    %165 = vmatprep.subr.bf16.mxu0 0
    %166 = vmatpush1.bf16.msra.mxu0 0
    %167 = vmatprep.mubr.bf16.mxu0 0
    %168 = vmatmul.mubr.bf16.gmra.mrb[0].mxu0 %v85
    %v169 = vpop.f32.mrb[0].mxu0
    %v170 = vadd.f32 %v79, %v169
    %v171 = vpop.f32.mrb[0].mxu0
    %v172 = vpop.f32.mrb[0].mxu0
    %v173 = vadd.f32 %v79, %v172
    %v174 = vpop.f32.mrb[0].mxu0
    %175 = vdwg.mxu0
    %v176 = vmax.f32 %v170, 0.0
    %v177 = vmax.f32 %v173, 0.0
    %v178 = vld [vmem:[#allocation2] sm:$0xff]
    %v179 = vld [vmem:[#allocation2 + $0x8] sm:$0xff]
    %v180 = vpack.c.bf16 %v177, %v176
    %v181 = vld [vmem:[#allocation6] sm:$0xf]
    %v182 = vld [vmem:[#allocation6 + $0x4] sm:$0xf]
    %v183 = vld [vmem:[#allocation6 + $0x8] sm:$0xf]
    %v184 = vld [vmem:[#allocation6 + $0xc] sm:$0xf]
    %v185 = vld [vmem:[#allocation6 + $0x10] sm:$0xf]
    %v186 = vld [vmem:[#allocation6 + $0x14] sm:$0xf]
    %v187 = vld [vmem:[#allocation6 + $0x18] sm:$0xf]
    %v188 = vld [vmem:[#allocation6 + $0x1c] sm:$0xf]
    %v189 = vld [vmem:[#allocation6 + $0x20] sm:$0xf]
    %v190 = vld [vmem:[#allocation6 + $0x24] sm:$0xf]
    %v191 = vld [vmem:[#allocation6 + $0x28] sm:$0xf]
    %v192 = vld [vmem:[#allocation6 + $0x2c] sm:$0xf]
    %v193 = vld [vmem:[#allocation6 + $0x30] sm:$0xf]
    %v194 = vld [vmem:[#allocation6 + $0x34] sm:$0xf]
    %v195 = vld [vmem:[#allocation6 + $0x38] sm:$0xf]
    %v196 = vld [vmem:[#allocation6 + $0x3c] sm:$0xf]
    %v213 = vunpack.c.l.b16 %v181
    %v214 = vunpack.c.l.b16 %v182
    %v215 = vunpack.c.l.b16 %v183
    %v216 = vunpack.c.l.b16 %v184
    %v217 = vunpack.c.l.b16 %v185
    %v218 = vunpack.c.l.b16 %v186
    %v219 = vunpack.c.l.b16 %v187
    %v220 = vunpack.c.l.b16 %v188
    %v221 = vunpack.c.l.b16 %v189
    %v222 = vunpack.c.l.b16 %v190
    %v223 = vunpack.c.l.b16 %v191
    %v224 = vunpack.c.l.b16 %v192
    %v225 = vunpack.c.l.b16 %v193
    %v226 = vunpack.c.l.b16 %v194
    %v227 = vunpack.c.l.b16 %v195
    %v228 = vunpack.c.l.b16 %v196
    %v229 = vpack.c.b16 %v214, %v213
    %v230 = vpack.c.b16 %v216, %v215
    %v231 = vpack.c.b16 %v218, %v217
    %v232 = vpack.c.b16 %v220, %v219
    %v233 = vpack.c.b16 %v222, %v221
    %v234 = vpack.c.b16 %v224, %v223
    %v235 = vpack.c.b16 %v226, %v225
    %v236 = vpack.c.b16 %v228, %v227
    %245 = vmatprep.subr.bf16.mxu0 0
    %246 = vmatpush1.bf16.msra.mxu0 %v229
    %247 = vmatprep.subr.bf16.mxu0 0
    %248 = vmatpush1.bf16.msra.mxu0 %v230
    %249 = vmatprep.subr.bf16.mxu0 0
    %250 = vmatpush1.bf16.msra.mxu0 %v231
    %251 = vmatprep.subr.bf16.mxu0 0
    %252 = vmatpush1.bf16.msra.mxu0 %v232
    %253 = vmatprep.subr.bf16.mxu0 0
    %254 = vmatpush1.bf16.msra.mxu0 %v233
    %255 = vmatprep.subr.bf16.mxu0 0
    %256 = vmatpush1.bf16.msra.mxu0 %v234
    %257 = vmatprep.subr.bf16.mxu0 0
    %258 = vmatpush1.bf16.msra.mxu0 %v235
    %259 = vmatprep.subr.bf16.mxu0 0
    %260 = vmatpush1.bf16.msra.mxu0 %v236
    %261 = vmatprep.subr.bf16.mxu0 0
    %262 = vmatpush1.bf16.msra.mxu0 0
    %263 = vmatprep.subr.bf16.mxu0 0
    %264 = vmatpush1.bf16.msra.mxu0 0
    %265 = vmatprep.subr.bf16.mxu0 0
    %266 = vmatpush1.bf16.msra.mxu0 0
    %267 = vmatprep.subr.bf16.mxu0 0
    %268 = vmatpush1.bf16.msra.mxu0 0
    %269 = vmatprep.subr.bf16.mxu0 0
    %270 = vmatpush1.bf16.msra.mxu0 0
    %271 = vmatprep.subr.bf16.mxu0 0
    %272 = vmatpush1.bf16.msra.mxu0 0
    %273 = vmatprep.subr.bf16.mxu0 0
    %274 = vmatpush1.bf16.msra.mxu0 0
    %275 = vmatprep.subr.bf16.mxu0 0
    %276 = vmatpush1.bf16.msra.mxu0 0
    %277 = vmatprep.mubr.bf16.mxu0 0
    %278 = vmatmul.mubr.bf16.gmra.mrb[0].mxu0 %v180
    %v279 = vpop.f32.mrb[0].mxu0
    %v280 = vadd.f32 0.0, %v279
    %v281 = vpop.f32.mrb[0].mxu0
    %v282 = vpop.f32.mrb[0].mxu0
    %v283 = vadd.f32 0.0, %v282
    %v284 = vpop.f32.mrb[0].mxu0
    %285 = vdwg.mxu0
    %v286 = vadd.f32 %v178, %v280
    %v287 = vadd.f32 %v179, %v283
    %288 = vst [vmem:[#allocation2] sm:$0xff] %v286
    %289 = vst [vmem:[#allocation2 + $0x8] sm:$0xff] %v287
    // Predicated region
    $region34: #{_ffn_2d.1} parent=1 // pred_check
      %p290 = pneg %p50
    $region35: #{_ffn_2d.1} parent=1 // pred_check_branch
      %292 = sbr.rel (%p290) target = $region37
    $region36: #{_ffn_2d.1} parent=1 // pred_region
      %v293 = vld [vmem:[#allocation2] sm:$0xff]
      %v294 = vld [vmem:[#allocation2 + $0x8] sm:$0xff]
      %v295 = vld [vmem:[%s4] sm:$0x1]
      %v297 = vlaneseq
      %v298 = vshrl.u32 %v297, 7
      %v299 = vsub.s32 0, %v298
      %v300 = vrot.slane %v295, %v299
      %v302 = vadd.f32 %v293, %v300
      %v303 = vadd.f32 %v294, %v300
      %v304 = vpack.c.bf16 %v303, %v302
      %v306 = vunpack.c.l.b16 %v304
      %v307 = vunpack.c.h.b16 %v304
      %v308 = vpack.c.b16 %v306, %v306
      %v309 = vpack.c.b16 %v307, %v307
      %312 = vst [vmem:[#allocation8] sm:$0xf] %v308
      %313 = vst [vmem:[#allocation8 + $0x4] sm:$0xf] %v309
    $region37: #{_ffn_2d.1} parent=1 // pred_fallthru
      _
    // Predicated region
    $region38: #{_ffn_2d.1} parent=1 // pred_check
      _
    $region39: #{_ffn_2d.1} parent=1 // pred_check_branch
      %315 = sbr.rel (0) target = $region41
    $region40: #{_ffn_2d.1} parent=1 // pred_region
      %s317 = ssub.s32 128, 128
      %318 = vsyncadd [#allocation5], %s317
      %s319 = sshll.u32 [#allocation8], 4
      %s320 = int_to_ptr.vmem [resolvable:$true] %s319
      %325 = dma.vmem_to_hbm [thread:$0]  %s320, 128, %s5, [#allocation5], 64, 64, 4
    $region41: #{_ffn_2d.1} parent=1 // pred_fallthru
      _
    // Predicated region
    $region42: #{_ffn_2d.1} parent=1 // pred_check
      _
    $region43: #{_ffn_2d.1} parent=1 // pred_check_branch
      %327 = sbr.rel (0) target = $region45
    $region44: #{_ffn_2d.1} parent=1 // pred_region
      %328 = dma.done [#allocation5], 128
    $region45: #{_ffn_2d.1} parent=1 // pred_fallthru
      _
    %329 = vsyncpa [#allocation4], 1
    %330 = vsyncpa [#allocation7], 1
    %331 = vsyncpa [#allocation5], 1

</llo_original>
